<compile_context>
chip_gen: v5e
topology: v5e:2x2
jax: 0.10.0
libtpu: 0.0.40
codegen_flags: <defaults>
</compile_context>

<pallas_src>
import jax
import jax.numpy as jnp
from jax import lax
from jax.experimental import pallas as pl
from jax.experimental.pallas import tpu as pltpu


def _round_up(x, m):
    return ((x + m - 1) // m) * m


def _ffn_swiglu_kernel(x_ref, w1_ref, v_ref, w2_ref, o_ref, acc_ref):
    # x_ref:   (tm, dim)   input rows                          (native dtype)
    # w1_ref:  (tn, dim)   slice of W1  (PyTorch [out, in] layout)
    # v_ref:   (tn, dim)   slice of V
    # w2_ref:  (dim, tn)   slice of W2
    # o_ref:   (tm, dim)   output rows
    # acc_ref: (tm, dim)   f32 accumulator, resident across the ff_dim grid axis
    n = pl.program_id(1)

    @pl.when(n == 0)
    def _():
        acc_ref[...] = jnp.zeros_like(acc_ref)

    x = x_ref[...]
    dn = (((1,), (1,)), ((), ()))  # contract last dim of both operands (== x @ W^T)

    h1 = lax.dot_general(x, w1_ref[...], dn, preferred_element_type=jnp.float32)
    hv = lax.dot_general(x, v_ref[...], dn, preferred_element_type=jnp.float32)
    gated = (h1 * jax.nn.sigmoid(h1)) * hv          # SwiGLU gate, f32 on VPU/EUP
    gated = gated.astype(x.dtype)                   # native dtype back into the MXU

    acc_ref[...] += lax.dot_general(
        gated, w2_ref[...], dn, preferred_element_type=jnp.float32)

    @pl.when(n == pl.num_programs(1) - 1)
    def _():
        o_ref[...] = acc_ref[...].astype(o_ref.dtype)


def _choose_tn(ff_p, dim_p, tm, w_itemsize, x_itemsize, budget_bytes):
    """Largest ff_dim tile (multiple of 128, divides ff_p) fitting the VMEM budget."""
    candidates = [ff_p] + [t for t in (8192, 4096, 2048, 1024, 512, 256, 128)
                           if t < ff_p]
    for tn in candidates:
        if ff_p % tn:
            continue
        w_bytes = 2 * (2 * tn * dim_p + dim_p * tn) * w_itemsize   # dbl-buffered W1,V,W2
        act_bytes = 2 * 2 * tm * dim_p * x_itemsize                # dbl-buffered x + out
        scratch_bytes = tm * dim_p * 4 + 3 * tm * tn * 4           # acc + h1/hv/gated
        if w_bytes + act_bytes + scratch_bytes <= budget_bytes:
            return tn
    return 128


def ffn_swiglu(x, w1, v, w2, *, tm=256, vmem_budget_bytes=48 * 1024 * 1024):
    """x: [B, S, dim]; w1, v: [ff_dim, dim]; w2: [dim, ff_dim] (PyTorch Linear layout)."""
    B, S, dim = x.shape
    ff_dim = w1.shape[0]
    assert w1.shape == (ff_dim, dim) and v.shape == (ff_dim, dim)
    assert w2.shape == (dim, ff_dim)

    M = B * S
    dim_p = _round_up(dim, 128)          # lane-dense feature dims
    ff_p = _round_up(ff_dim, 128)
    tm_eff = min(_round_up(tm, 8), _round_up(M, 8))
    M_p = _round_up(M, tm_eff)

    x2d = x.reshape(M, dim)
    if (M_p, dim_p) != (M, dim):
        x2d = jnp.pad(x2d, ((0, M_p - M), (0, dim_p - dim)))
    if (ff_p, dim_p) != (ff_dim, dim):   # no-op (no HBM copies) for lane-dense models
        w1 = jnp.pad(w1, ((0, ff_p - ff_dim), (0, dim_p - dim)))
        v = jnp.pad(v, ((0, ff_p - ff_dim), (0, dim_p - dim)))
        w2 = jnp.pad(w2, ((0, dim_p - dim), (0, ff_p - ff_dim)))

    tn = _choose_tn(ff_p, dim_p, tm_eff, w1.dtype.itemsize, x2d.dtype.itemsize,
                    vmem_budget_bytes)
    grid = (M_p // tm_eff, ff_p // tn)

    cost = pl.CostEstimate(
        flops=6 * M_p * dim_p * ff_p,                      # 3 matmuls x 2 flops/MAC
        transcendentals=M_p * ff_p,                        # sigmoid
        bytes_accessed=(x2d.size * x2d.dtype.itemsize
                        + (w1.size + v.size + w2.size) * w1.dtype.itemsize
                        + M_p * dim_p * x2d.dtype.itemsize),
    )

    out2d = pl.pallas_call(
        _ffn_swiglu_kernel,
        out_shape=jax.ShapeDtypeStruct((M_p, dim_p), x.dtype),
        grid_spec=pltpu.PrefetchScalarGridSpec(
            num_scalar_prefetch=0,
            grid=grid,
            in_specs=[
                pl.BlockSpec((tm_eff, dim_p), lambda i, n: (i, 0)),   # x rows
                pl.BlockSpec((tn, dim_p), lambda i, n: (n, 0)),       # W1 slab
                pl.BlockSpec((tn, dim_p), lambda i, n: (n, 0)),       # V slab
                pl.BlockSpec((dim_p, tn), lambda i, n: (0, n)),       # W2 slab
            ],
            out_specs=pl.BlockSpec((tm_eff, dim_p), lambda i, n: (i, 0)),
            scratch_shapes=[pltpu.VMEM((tm_eff, dim_p), jnp.float32)],
        ),
        compiler_params=pltpu.CompilerParams(
            dimension_semantics=("parallel", "arbitrary"),
            vmem_limit_bytes=64 * 1024 * 1024,
        ),
        cost_estimate=cost,
    )(x2d, w1, v, w2)

    return out2d[:M, :dim].reshape(B, S, dim)


def _ref_ffn_swiglu(x, w1, v, w2):
    # Pure-JAX reference of the PyTorch forward (eval mode).
    h1 = jnp.einsum("bsd,fd->bsf", x, w1)
    hv = jnp.einsum("bsd,fd->bsf", x, v)
    g = (h1 * jax.nn.sigmoid(h1)) * hv
    return jnp.einsum("bsf,df->bsd", g, w2)


if __name__ == "__main__":
    B, S, dim, ff_dim = 2, 8, 128, 256

    key = jax.random.PRNGKey(0)
    kx, k1, k2, k3 = jax.random.split(key, 4)

    x = jax.random.normal(kx, (B, S, dim), dtype=jnp.float32)
    # Deterministic "Linear" weights (PyTorch layout: [out_features, in_features]).
    w1 = jax.random.normal(k1, (ff_dim, dim), dtype=jnp.float32) * 0.05
    v = jax.random.normal(k2, (ff_dim, dim), dtype=jnp.float32) * 0.05
    w2 = jax.random.normal(k3, (dim, ff_dim), dtype=jnp.float32) * 0.05

    out = jax.block_until_ready(ffn_swiglu(x, w1, v, w2))
    ref = _ref_ffn_swiglu(x, w1, v, w2)

    assert out.shape == (B, S, dim)
    assert jnp.allclose(out, ref, atol=1e-4, rtol=1e-4), "mismatch vs reference"

    print("KERNEL_OK")
</pallas_src>

<mosaic_0001>
module attributes {stable_mosaic.version = 11 : i64} {
  func.func @_ffn_swiglu_kernel(%arg0: i32, %arg1: i32, %arg2: memref<16x128xf32, #tpu.memory_space<vmem>>, %arg3: memref<256x128xf32, #tpu.memory_space<vmem>>, %arg4: memref<256x128xf32, #tpu.memory_space<vmem>>, %arg5: memref<128x256xf32, #tpu.memory_space<vmem>>, %arg6: memref<16x128xf32, #tpu.memory_space<vmem>>, %arg7: memref<16x128xf32, #tpu.memory_space<vmem>>) attributes {dimension_semantics = [#tpu.dimension_semantics<parallel>, #tpu.dimension_semantics<arbitrary>], iteration_bounds = array<i64: 1, 1>, scalar_prefetch = 0 : i64, scratch_operands = 1 : i64, tpu.core_type = #tpu.core_type<tc>, window_params = [{transform_indices = @transform_0, window_bounds = array<i64: 16, 128>}, {transform_indices = @transform_1, window_bounds = array<i64: 256, 128>}, {transform_indices = @transform_2, window_bounds = array<i64: 256, 128>}, {transform_indices = @transform_3, window_bounds = array<i64: 128, 256>}, {transform_indices = @transform_4, window_bounds = array<i64: 16, 128>}]} {
    %c0_i32 = arith.constant 0 : i32
    %0 = arith.cmpi eq, %arg1, %c0_i32 : i32
    %1 = arith.extui %0 : i1 to i32
    %c0_i32_0 = arith.constant 0 : i32
    %2 = arith.cmpi ne, %1, %c0_i32_0 : i32
    scf.if %2 {
      %cst_17 = arith.constant 0.000000e+00 : f32
      %23 = vector.broadcast %cst_17 : f32 to vector<16x128xf32>
      %c0_18 = arith.constant 0 : index
      %c0_19 = arith.constant 0 : index
      %24 = vector.load %arg7[%c0_18, %c0_19] : memref<16x128xf32, #tpu.memory_space<vmem>>, vector<16x128xf32>
      tpu.vector_store %arg7[%c0_18, %c0_19], %23 {strides = array<i32>} : memref<16x128xf32, #tpu.memory_space<vmem>>, vector<16x128xf32>,
    } else {
    }
    %c0 = arith.constant 0 : index
    %c0_1 = arith.constant 0 : index
    %3 = vector.load %arg2[%c0, %c0_1] : memref<16x128xf32, #tpu.memory_space<vmem>>, vector<16x128xf32>
    %c0_2 = arith.constant 0 : index
    %c0_3 = arith.constant 0 : index
    %4 = vector.load %arg3[%c0_2, %c0_3] : memref<256x128xf32, #tpu.memory_space<vmem>>, vector<256x128xf32>
    %cst = arith.constant dense<0.000000e+00> : vector<16x256xf32>
    %5 = tpu.matmul %3, %4, %cst {dimension_numbers = #tpu.dot_dimension_numbers<[1], [1], [0], [0], [0, 0, 1, 0], [], []>} : vector<16x128xf32>, vector<256x128xf32>, vector<16x256xf32> -> vector<16x256xf32>
    %c0_4 = arith.constant 0 : index
    %c0_5 = arith.constant 0 : index
    %6 = vector.load %arg4[%c0_4, %c0_5] : memref<256x128xf32, #tpu.memory_space<vmem>>, vector<256x128xf32>
    %cst_6 = arith.constant dense<0.000000e+00> : vector<16x256xf32>
    %7 = tpu.matmul %3, %6, %cst_6 {dimension_numbers = #tpu.dot_dimension_numbers<[1], [1], [0], [0], [0, 0, 1, 0], [], []>} : vector<16x128xf32>, vector<256x128xf32>, vector<16x256xf32> -> vector<16x256xf32>
    %8 = arith.negf %5 : vector<16x256xf32>
    %9 = math.exp %8 : vector<16x256xf32>
    %cst_7 = arith.constant 1.000000e+00 : f32
    %10 = vector.broadcast %cst_7 : f32 to vector<16x256xf32>
    %11 = arith.addf %10, %9 : vector<16x256xf32>
    %12 = arith.divf %10, %11 : vector<16x256xf32>
    %13 = arith.mulf %5, %12 : vector<16x256xf32>
    %14 = arith.mulf %13, %7 : vector<16x256xf32>
    %c0_8 = arith.constant 0 : index
    %c0_9 = arith.constant 0 : index
    %15 = vector.load %arg7[%c0_8, %c0_9] : memref<16x128xf32, #tpu.memory_space<vmem>>, vector<16x128xf32>
    %c0_10 = arith.constant 0 : index
    %c0_11 = arith.constant 0 : index
    %16 = vector.load %arg5[%c0_10, %c0_11] : memref<128x256xf32, #tpu.memory_space<vmem>>, vector<128x256xf32>
    %cst_12 = arith.constant dense<0.000000e+00> : vector<16x128xf32>
    %17 = tpu.matmul %14, %16, %cst_12 {dimension_numbers = #tpu.dot_dimension_numbers<[1], [1], [0], [0], [0, 0, 1, 0], [], []>} : vector<16x256xf32>, vector<128x256xf32>, vector<16x128xf32> -> vector<16x128xf32>
    %18 = arith.addf %15, %17 : vector<16x128xf32>
    %c0_13 = arith.constant 0 : index
    %c0_14 = arith.constant 0 : index
    %19 = vector.load %arg7[%c0_13, %c0_14] : memref<16x128xf32, #tpu.memory_space<vmem>>, vector<16x128xf32>
    tpu.vector_store %arg7[%c0_13, %c0_14], %18 {strides = array<i32>} : memref<16x128xf32, #tpu.memory_space<vmem>>, vector<16x128xf32>,
    %c0_i32_15 = arith.constant 0 : i32
    %20 = arith.cmpi eq, %arg1, %c0_i32_15 : i32
    %21 = arith.extui %20 : i1 to i32
    %c0_i32_16 = arith.constant 0 : i32
    %22 = arith.cmpi ne, %21, %c0_i32_16 : i32
    scf.if %22 {
      %c0_17 = arith.constant 0 : index
      %c0_18 = arith.constant 0 : index
      %23 = vector.load %arg7[%c0_17, %c0_18] : memref<16x128xf32, #tpu.memory_space<vmem>>, vector<16x128xf32>
      %c0_19 = arith.constant 0 : index
      %c0_20 = arith.constant 0 : index
      %24 = vector.load %arg6[%c0_19, %c0_20] : memref<16x128xf32, #tpu.memory_space<vmem>>, vector<16x128xf32>
      tpu.vector_store %arg6[%c0_19, %c0_20], %23 {strides = array<i32>} : memref<16x128xf32, #tpu.memory_space<vmem>>, vector<16x128xf32>,
    } else {
    }
    return
  }
  func.func @transform_0(%arg0: i32, %arg1: i32) -> (i32, i32) {
    %c0_i32 = arith.constant 0 : i32
    %c0_i32_0 = arith.constant 0 : i32
    return %arg0, %c0_i32 : i32, i32
  }
  func.func @transform_1(%arg0: i32, %arg1: i32) -> (i32, i32) {
    %c0_i32 = arith.constant 0 : i32
    %c0_i32_0 = arith.constant 0 : i32
    return %arg1, %c0_i32 : i32, i32
  }
  func.func @transform_2(%arg0: i32, %arg1: i32) -> (i32, i32) {
    %c0_i32 = arith.constant 0 : i32
    %c0_i32_0 = arith.constant 0 : i32
    return %arg1, %c0_i32 : i32, i32
  }
  func.func @transform_3(%arg0: i32, %arg1: i32) -> (i32, i32) {
    %c0_i32 = arith.constant 0 : i32
    %c0_i32_0 = arith.constant 0 : i32
    return %c0_i32, %arg1 : i32, i32
  }
  func.func @transform_4(%arg0: i32, %arg1: i32) -> (i32, i32) {
    %c0_i32 = arith.constant 0 : i32
    %c0_i32_0 = arith.constant 0 : i32
    return %arg0, %c0_i32 : i32, i32
  }
}

</mosaic_0001>

<llo_original>
// kernel: tpu_custom_call.1
$region0: #{tpu_custom_call.1}
  #allocation0 [shape = 'u32[]', space=smem, size = 0x4, offset = 0x4, fixed_abs, tag = 'smem constant byte address 0x4 - core index']
  #allocation1 [shape = 'u32[72,128]{1,0:T(1,128)}', space=vmem, size = 0x9000, scoped, tag = 'internal scratch']
  #allocation2 [shape = 'f32[16,128]{1,0:T(8,128)}', space=vmem, size = 0x2000, scoped, tag = 'scratch operand']
  %s0 = inlined_call_operand.hbm [shape: f32[16,128], index: 0, kind: input, shape index: {}]
  %s1 = inlined_call_operand.hbm [shape: f32[256,128], index: 1, kind: input, shape index: {}]
  %s2 = inlined_call_operand.hbm [shape: f32[256,128], index: 2, kind: input, shape index: {}]
  %s3 = inlined_call_operand.hbm [shape: f32[128,256], index: 3, kind: input, shape index: {}]
  %s4 = inlined_call_operand.hbm [shape: f32[16,128], index: 4, kind: output, shape index: {}]
  %s5 = sld [smem:[#allocation0]]
  $region50: #{tpu_custom_call.1} parent=0
    _
  %s7 = ssub.s32 1, %s5
  %s8 = scalar_select 0, %s7, %s5
  $region1: #{tpu_custom_call.1} parent=0
    #allocation3 [shape = 'u8[8192]{0}', space=vmem, size = 0x2000, scoped, tag = 'input window, operand 0, single buffered']
    #allocation4 [shape = 's32[1]{0}', space=sflag, size = 0x4, scoped, tag = 'scoped memory for tpu_custom_call.1']
    #allocation5 [shape = 's32[1]{0}', space=sflag, size = 0x4, scoped, tag = 'scoped memory for tpu_custom_call.1']
    #allocation6 [shape = 'u8[131072]{0}', space=vmem, size = 0x20000, scoped, tag = 'input window, operand 1, single buffered']
    #allocation7 [shape = 's32[1]{0}', space=sflag, size = 0x4, scoped, tag = 'scoped memory for tpu_custom_call.1']
    #allocation8 [shape = 'u8[131072]{0}', space=vmem, size = 0x20000, scoped, tag = 'input window, operand 2, single buffered']
    #allocation9 [shape = 'u8[131072]{0}', space=vmem, size = 0x20000, scoped, tag = 'input window, operand 3, single buffered']
    #allocation10 [shape = 's32[1]{0}', space=sflag, size = 0x4, scoped, tag = 'scoped memory for tpu_custom_call.1']
    #allocation11 [shape = 'u8[8192]{0}', space=vmem, size = 0x2000, scoped, tag = 'output window, operand 0, single buffered']
    %9 = vsyncpa [#allocation4], 0
    %10 = vsyncpa [#allocation7], 0
    %11 = vsyncpa [#allocation10], 0
    %12 = vsyncpa [#allocation5], 0
    // Predicated region
    $region2: #{tpu_custom_call.1} parent=1 // pred_check
      _
    $region3: #{tpu_custom_call.1} parent=1 // pred_check_branch
      %14 = sbr.rel (0) target = $region5
    $region4: #{tpu_custom_call.1} parent=1 // pred_region
      %16 = vsyncadd [#allocation4], 0
      %s17 = sshll.u32 %s0, 4
      %s18 = int_to_ptr.hbm [resolvable:$true] %s17
      %s19 = sshll.u32 [#allocation3], 4
      %s20 = int_to_ptr.vmem [resolvable:$true] %s19
      %25 = dma.hbm_to_vmem [thread:$0]  %s18, 256, %s20, [#allocation4], 128, 128, 8
    $region5: #{tpu_custom_call.1} parent=1 // pred_fallthru
      _
    // Predicated region
    $region6: #{tpu_custom_call.1} parent=1 // pred_check
      _
    $region7: #{tpu_custom_call.1} parent=1 // pred_check_branch
      %27 = sbr.rel (0) target = $region9
    $region8: #{tpu_custom_call.1} parent=1 // pred_region
      %29 = vsyncadd [#allocation7], 0
      %s30 = sshll.u32 %s1, 4
      %s31 = int_to_ptr.hbm [resolvable:$true] %s30
      %s32 = sshll.u32 [#allocation6], 4
      %s33 = int_to_ptr.vmem [resolvable:$true] %s32
      %38 = dma.hbm_to_vmem [thread:$0]  %s31, 4096, %s33, [#allocation7], 128, 128, 8
    $region9: #{tpu_custom_call.1} parent=1 // pred_fallthru
      _
    // Predicated region
    $region10: #{tpu_custom_call.1} parent=1 // pred_check
      _
    $region11: #{tpu_custom_call.1} parent=1 // pred_check_branch
      %40 = sbr.rel (0) target = $region13
    $region12: #{tpu_custom_call.1} parent=1 // pred_region
      %42 = vsyncadd [#allocation7], 0
      %s43 = sshll.u32 %s2, 4
      %s44 = int_to_ptr.hbm [resolvable:$true] %s43
      %s45 = sshll.u32 [#allocation8], 4
      %s46 = int_to_ptr.vmem [resolvable:$true] %s45
      %51 = dma.hbm_to_vmem [thread:$0]  %s44, 4096, %s46, [#allocation7], 128, 128, 8
    $region13: #{tpu_custom_call.1} parent=1 // pred_fallthru
      _
    // Predicated region
    $region14: #{tpu_custom_call.1} parent=1 // pred_check
      _
    $region15: #{tpu_custom_call.1} parent=1 // pred_check_branch
      %53 = sbr.rel (0) target = $region17
    $region16: #{tpu_custom_call.1} parent=1 // pred_region
      %55 = vsyncadd [#allocation10], 0
      %s56 = sshll.u32 %s3, 4
      %s57 = int_to_ptr.hbm [resolvable:$true] %s56
      %s58 = sshll.u32 [#allocation9], 4
      %s59 = int_to_ptr.vmem [resolvable:$true] %s58
      %64 = dma.hbm_to_vmem [thread:$0]  %s57, 4096, %s59, [#allocation10], 256, 256, 16
    $region17: #{tpu_custom_call.1} parent=1 // pred_fallthru
      _
    // Predicated region
    $region18: #{tpu_custom_call.1} parent=1 // pred_check
      _
    $region19: #{tpu_custom_call.1} parent=1 // pred_check_branch
      %66 = sbr.rel (0) target = $region21
    $region20: #{tpu_custom_call.1} parent=1 // pred_region
      %68 = dma.done [#allocation4], 256
    $region21: #{tpu_custom_call.1} parent=1 // pred_fallthru
      _
    // Predicated region
    $region22: #{tpu_custom_call.1} parent=1 // pred_check
      _
    $region23: #{tpu_custom_call.1} parent=1 // pred_check_branch
      %70 = sbr.rel (0) target = $region25
    $region24: #{tpu_custom_call.1} parent=1 // pred_region
      %72 = dma.done [#allocation7], 4096
    $region25: #{tpu_custom_call.1} parent=1 // pred_fallthru
      _
    // Predicated region
    $region26: #{tpu_custom_call.1} parent=1 // pred_check
      _
    $region27: #{tpu_custom_call.1} parent=1 // pred_check_branch
      %74 = sbr.rel (0) target = $region29
    $region28: #{tpu_custom_call.1} parent=1 // pred_region
      %76 = dma.done [#allocation7], 4096
    $region29: #{tpu_custom_call.1} parent=1 // pred_fallthru
      _
    // Predicated region
    $region30: #{tpu_custom_call.1} parent=1 // pred_check
      _
    $region31: #{tpu_custom_call.1} parent=1 // pred_check_branch
      %78 = sbr.rel (0) target = $region33
    $region32: #{tpu_custom_call.1} parent=1 // pred_region
      %80 = dma.done [#allocation10], 4096
    $region33: #{tpu_custom_call.1} parent=1 // pred_fallthru
      _
    %p81 = scmp.eq.s32.totalorder 0, 0
    // Predicated region
    $region34: #{tpu_custom_call.1} parent=1 // pred_check
      %p82 = pneg %p81
    $region35: #{tpu_custom_call.1} parent=1 // pred_check_branch
      %84 = sbr.rel (%p82) target = $region37
    $region36: #{tpu_custom_call.1} parent=1 // pred_region
      %85 = vst [vmem:[#allocation2] sm:$0xff] 0.0
      %86 = vst [vmem:[#allocation2 + $0x8] sm:$0xff] 0.0
    $region37: #{tpu_custom_call.1} parent=1 // pred_fallthru
      _
    %v87 = vld [vmem:[#allocation3] sm:$0xff]
    %v88 = vld [vmem:[#allocation3 + $0x8] sm:$0xff]
    %v89 = vld [vmem:[#allocation6] sm:$0xff]
    %v90 = vld [vmem:[#allocation6 + $0x8] sm:$0xff]
    %v91 = vld [vmem:[#allocation6 + $0x10] sm:$0xff]
    %v92 = vld [vmem:[#allocation6 + $0x18] sm:$0xff]
    %v93 = vld [vmem:[#allocation6 + $0x20] sm:$0xff]
    %v94 = vld [vmem:[#allocation6 + $0x28] sm:$0xff]
    %v95 = vld [vmem:[#allocation6 + $0x30] sm:$0xff]
    %v96 = vld [vmem:[#allocation6 + $0x38] sm:$0xff]
    %v97 = vld [vmem:[#allocation6 + $0x40] sm:$0xff]
    %v98 = vld [vmem:[#allocation6 + $0x48] sm:$0xff]
    %v99 = vld [vmem:[#allocation6 + $0x50] sm:$0xff]
    %v100 = vld [vmem:[#allocation6 + $0x58] sm:$0xff]
    %v101 = vld [vmem:[#allocation6 + $0x60] sm:$0xff]
    %v102 = vld [vmem:[#allocation6 + $0x68] sm:$0xff]
    %v103 = vld [vmem:[#allocation6 + $0x70] sm:$0xff]
    %v104 = vld [vmem:[#allocation6 + $0x78] sm:$0xff]
    %v105 = vld [vmem:[#allocation6 + $0x80] sm:$0xff]
    %v106 = vld [vmem:[#allocation6 + $0x88] sm:$0xff]
    %v107 = vld [vmem:[#allocation6 + $0x90] sm:$0xff]
    %v108 = vld [vmem:[#allocation6 + $0x98] sm:$0xff]
    %v109 = vld [vmem:[#allocation6 + $0xa0] sm:$0xff]
    %v110 = vld [vmem:[#allocation6 + $0xa8] sm:$0xff]
    %v111 = vld [vmem:[#allocation6 + $0xb0] sm:$0xff]
    %v112 = vld [vmem:[#allocation6 + $0xb8] sm:$0xff]
    %v113 = vld [vmem:[#allocation6 + $0xc0] sm:$0xff]
    %v114 = vld [vmem:[#allocation6 + $0xc8] sm:$0xff]
    %v115 = vld [vmem:[#allocation6 + $0xd0] sm:$0xff]
    %v116 = vld [vmem:[#allocation6 + $0xd8] sm:$0xff]
    %v117 = vld [vmem:[#allocation6 + $0xe0] sm:$0xff]
    %v118 = vld [vmem:[#allocation6 + $0xe8] sm:$0xff]
    %v119 = vld [vmem:[#allocation6 + $0xf0] sm:$0xff]
    %v120 = vld [vmem:[#allocation6 + $0xf8] sm:$0xff]
    %121 = vmatpush.xpose.msra.mxu0 %v104
    %122 = vmatpush.xpose.msra.mxu0 %v103
    %123 = vmatpush.xpose.msra.mxu0 %v102
    %124 = vmatpush.xpose.msra.mxu0 %v101
    %125 = vmatpush.xpose.msra.mxu0 %v100
    %126 = vmatpush.xpose.msra.mxu0 %v99
    %127 = vmatpush.xpose.msra.mxu0 %v98
    %128 = vmatpush.xpose.msra.mxu0 %v97
    %129 = vmatpush.xpose.msra.mxu0 %v96
    %130 = vmatpush.xpose.msra.mxu0 %v95
    %131 = vmatpush.xpose.msra.mxu0 %v94
    %132 = vmatpush.xpose.msra.mxu0 %v93
    %133 = vmatpush.xpose.msra.mxu0 %v92
    %134 = vmatpush.xpose.msra.mxu0 %v91
    %135 = vmatpush.xpose.msra.mxu0 %v90
    %136 = vmatpush.xpose.msra.mxu0 %v89
    %137 = vmatmul.f32.gmra.mxu0 %v87
    %v138 = vpop.f32.mrf.mxu0
    %v139 = vadd.f32 0.0, %v138
    %140 = vmatmul.f32.gmra.mxu0 %v88
    %v141 = vpop.f32.mrf.mxu0
    %v142 = vadd.f32 0.0, %v141
    %143 = vdwg.mxu0
    %144 = vmatpush.xpose.msra.mxu0 %v120
    %145 = vmatpush.xpose.msra.mxu0 %v119
    %146 = vmatpush.xpose.msra.mxu0 %v118
    %147 = vmatpush.xpose.msra.mxu0 %v117
    %148 = vmatpush.xpose.msra.mxu0 %v116
    %149 = vmatpush.xpose.msra.mxu0 %v115
    %150 = vmatpush.xpose.msra.mxu0 %v114
    %151 = vmatpush.xpose.msra.mxu0 %v113
    %152 = vmatpush.xpose.msra.mxu0 %v112
    %153 = vmatpush.xpose.msra.mxu0 %v111
    %154 = vmatpush.xpose.msra.mxu0 %v110
    %155 = vmatpush.xpose.msra.mxu0 %v109
    %156 = vmatpush.xpose.msra.mxu0 %v108
    %157 = vmatpush.xpose.msra.mxu0 %v107
    %158 = vmatpush.xpose.msra.mxu0 %v106
    %159 = vmatpush.xpose.msra.mxu0 %v105
    %160 = vmatmul.f32.gmra.mxu0 %v87
    %v161 = vpop.f32.mrf.mxu0
    %v162 = vadd.f32 0.0, %v161
    %163 = vmatmul.f32.gmra.mxu0 %v88
    %v164 = vpop.f32.mrf.mxu0
    %v165 = vadd.f32 0.0, %v164
    %166 = vdwg.mxu0
    %v167 = vld [vmem:[#allocation8] sm:$0xff]
    %v168 = vld [vmem:[#allocation8 + $0x8] sm:$0xff]
    %v169 = vld [vmem:[#allocation8 + $0x10] sm:$0xff]
    %v170 = vld [vmem:[#allocation8 + $0x18] sm:$0xff]
    %v171 = vld [vmem:[#allocation8 + $0x20] sm:$0xff]
    %v172 = vld [vmem:[#allocation8 + $0x28] sm:$0xff]
    %v173 = vld [vmem:[#allocation8 + $0x30] sm:$0xff]
    %v174 = vld [vmem:[#allocation8 + $0x38] sm:$0xff]
    %v175 = vld [vmem:[#allocation8 + $0x40] sm:$0xff]
    %v176 = vld [vmem:[#allocation8 + $0x48] sm:$0xff]
    %v177 = vld [vmem:[#allocation8 + $0x50] sm:$0xff]
    %v178 = vld [vmem:[#allocation8 + $0x58] sm:$0xff]
    %v179 = vld [vmem:[#allocation8 + $0x60] sm:$0xff]
    %v180 = vld [vmem:[#allocation8 + $0x68] sm:$0xff]
    %v181 = vld [vmem:[#allocation8 + $0x70] sm:$0xff]
    %v182 = vld [vmem:[#allocation8 + $0x78] sm:$0xff]
    %v183 = vld [vmem:[#allocation8 + $0x80] sm:$0xff]
    %v184 = vld [vmem:[#allocation8 + $0x88] sm:$0xff]
    %v185 = vld [vmem:[#allocation8 + $0x90] sm:$0xff]
    %v186 = vld [vmem:[#allocation8 + $0x98] sm:$0xff]
    %v187 = vld [vmem:[#allocation8 + $0xa0] sm:$0xff]
    %v188 = vld [vmem:[#allocation8 + $0xa8] sm:$0xff]
    %v189 = vld [vmem:[#allocation8 + $0xb0] sm:$0xff]
    %v190 = vld [vmem:[#allocation8 + $0xb8] sm:$0xff]
    %v191 = vld [vmem:[#allocation8 + $0xc0] sm:$0xff]
    %v192 = vld [vmem:[#allocation8 + $0xc8] sm:$0xff]
    %v193 = vld [vmem:[#allocation8 + $0xd0] sm:$0xff]
    %v194 = vld [vmem:[#allocation8 + $0xd8] sm:$0xff]
    %v195 = vld [vmem:[#allocation8 + $0xe0] sm:$0xff]
    %v196 = vld [vmem:[#allocation8 + $0xe8] sm:$0xff]
    %v197 = vld [vmem:[#allocation8 + $0xf0] sm:$0xff]
    %v198 = vld [vmem:[#allocation8 + $0xf8] sm:$0xff]
    %199 = vmatpush.xpose.msra.mxu0 %v182
    %200 = vmatpush.xpose.msra.mxu0 %v181
    %201 = vmatpush.xpose.msra.mxu0 %v180
    %202 = vmatpush.xpose.msra.mxu0 %v179
    %203 = vmatpush.xpose.msra.mxu0 %v178
    %204 = vmatpush.xpose.msra.mxu0 %v177
    %205 = vmatpush.xpose.msra.mxu0 %v176
    %206 = vmatpush.xpose.msra.mxu0 %v175
    %207 = vmatpush.xpose.msra.mxu0 %v174
    %208 = vmatpush.xpose.msra.mxu0 %v173
    %209 = vmatpush.xpose.msra.mxu0 %v172
    %210 = vmatpush.xpose.msra.mxu0 %v171
    %211 = vmatpush.xpose.msra.mxu0 %v170
    %212 = vmatpush.xpose.msra.mxu0 %v169
    %213 = vmatpush.xpose.msra.mxu0 %v168
    %214 = vmatpush.xpose.msra.mxu0 %v167
    %215 = vmatmul.f32.gmra.mxu0 %v87
    %v216 = vpop.f32.mrf.mxu0
    %v217 = vadd.f32 0.0, %v216
    %218 = vmatmul.f32.gmra.mxu0 %v88
    %v219 = vpop.f32.mrf.mxu0
    %v220 = vadd.f32 0.0, %v219
    %221 = vdwg.mxu0
    %222 = vmatpush.xpose.msra.mxu0 %v198
    %223 = vmatpush.xpose.msra.mxu0 %v197
    %224 = vmatpush.xpose.msra.mxu0 %v196
    %225 = vmatpush.xpose.msra.mxu0 %v195
    %226 = vmatpush.xpose.msra.mxu0 %v194
    %227 = vmatpush.xpose.msra.mxu0 %v193
    %228 = vmatpush.xpose.msra.mxu0 %v192
    %229 = vmatpush.xpose.msra.mxu0 %v191
    %230 = vmatpush.xpose.msra.mxu0 %v190
    %231 = vmatpush.xpose.msra.mxu0 %v189
    %232 = vmatpush.xpose.msra.mxu0 %v188
    %233 = vmatpush.xpose.msra.mxu0 %v187
    %234 = vmatpush.xpose.msra.mxu0 %v186
    %235 = vmatpush.xpose.msra.mxu0 %v185
    %236 = vmatpush.xpose.msra.mxu0 %v184
    %237 = vmatpush.xpose.msra.mxu0 %v183
    %238 = vmatmul.f32.gmra.mxu0 %v87
    %v239 = vpop.f32.mrf.mxu0
    %v240 = vadd.f32 0.0, %v239
    %241 = vmatmul.f32.gmra.mxu0 %v88
    %v242 = vpop.f32.mrf.mxu0
    %v243 = vadd.f32 0.0, %v242
    %244 = vdwg.mxu0
    %v245 = vxor.u32 %v139, 2147483648
    %v246 = vxor.u32 %v162, 2147483648
    %v247 = vxor.u32 %v142, 2147483648
    %v248 = vxor.u32 %v165, 2147483648
    %v249 = vmul.f32 %v245, 1.442695
    %v250 = vpow.pop %v249
    %v251 = vmul.f32 %v246, 1.442695
    %v252 = vpow.pop %v251
    %v253 = vmul.f32 %v247, 1.442695
    %v254 = vpow.pop %v253
    %v255 = vmul.f32 %v248, 1.442695
    %v256 = vpow.pop %v255
    %v257 = vadd.f32 %v250, 1.0
    %v258 = vadd.f32 %v252, 1.0
    %v259 = vadd.f32 %v254, 1.0
    %v260 = vadd.f32 %v256, 1.0
    %v261 = vrcp.pop %v257
    %v262 = vmul.f32 %v257, %v261
    %v263 = vsub.f32 1.0, %v262
    %v264 = vmul.f32 %v261, %v263
    %v265 = vadd.f32 %v261, %v264
    %vm266 = vweird.f32 %v257
    %vm267 = vweird.f32 %v261
    %vm268 = vmor %vm266, %vm267
    %v269 = vsel %vm268, %v261, %v265
    %v270 = vand.u32 2147483647, %v257
    %vm271 = vcmp.eq.f32.partialorder %v270, 8.507059e+37
    %v272 = vand.u32 %v257, 2147483648
    %v273 = vor.u32 1.1754944e-38, %v272
    %v274 = vsel %vm271, %v273, %v269
    %v275 = vmul.f32 1.0, %v274
    %v276 = vrcp.pop %v258
    %v277 = vmul.f32 %v258, %v276
    %v278 = vsub.f32 1.0, %v277
    %v279 = vmul.f32 %v276, %v278
    %v280 = vadd.f32 %v276, %v279
    %vm281 = vweird.f32 %v258
    %vm282 = vweird.f32 %v276
    %vm283 = vmor %vm281, %vm282
    %v284 = vsel %vm283, %v276, %v280
    %v285 = vand.u32 2147483647, %v258
    %vm286 = vcmp.eq.f32.partialorder %v285, 8.507059e+37
    %v287 = vand.u32 %v258, 2147483648
    %v288 = vor.u32 1.1754944e-38, %v287
    %v289 = vsel %vm286, %v288, %v284
    %v290 = vmul.f32 1.0, %v289
    %v291 = vrcp.pop %v259
    %v292 = vmul.f32 %v259, %v291
    %v293 = vsub.f32 1.0, %v292
    %v294 = vmul.f32 %v291, %v293
    %v295 = vadd.f32 %v291, %v294
    %vm296 = vweird.f32 %v259
    %vm297 = vweird.f32 %v291
    %vm298 = vmor %vm296, %vm297
    %v299 = vsel %vm298, %v291, %v295
    %v300 = vand.u32 2147483647, %v259
    %vm301 = vcmp.eq.f32.partialorder %v300, 8.507059e+37
    %v302 = vand.u32 %v259, 2147483648
    %v303 = vor.u32 1.1754944e-38, %v302
    %v304 = vsel %vm301, %v303, %v299
    %v305 = vmul.f32 1.0, %v304
    %v306 = vrcp.pop %v260
    %v307 = vmul.f32 %v260, %v306
    %v308 = vsub.f32 1.0, %v307
    %v309 = vmul.f32 %v306, %v308
    %v310 = vadd.f32 %v306, %v309
    %vm311 = vweird.f32 %v260
    %vm312 = vweird.f32 %v306
    %vm313 = vmor %vm311, %vm312
    %v314 = vsel %vm313, %v306, %v310
    %v315 = vand.u32 2147483647, %v260
    %vm316 = vcmp.eq.f32.partialorder %v315, 8.507059e+37
    %v317 = vand.u32 %v260, 2147483648
    %v318 = vor.u32 1.1754944e-38, %v317
    %v319 = vsel %vm316, %v318, %v314
    %v320 = vmul.f32 1.0, %v319
    %v321 = vmul.f32 %v139, %v275
    %v322 = vmul.f32 %v162, %v290
    %v323 = vmul.f32 %v142, %v305
    %v324 = vmul.f32 %v165, %v320
    %v325 = vmul.f32 %v321, %v217
    %v326 = vmul.f32 %v322, %v240
    %v327 = vmul.f32 %v323, %v220
    %v328 = vmul.f32 %v324, %v243
    %v329 = vld [vmem:[#allocation2] sm:$0xff]
    %v330 = vld [vmem:[#allocation2 + $0x8] sm:$0xff]
    %v331 = vld [vmem:[#allocation9] sm:$0xff]
    %v332 = vld [vmem:[#allocation9 + $0x8] sm:$0xff]
    %v333 = vld [vmem:[#allocation9 + $0x10] sm:$0xff]
    %v334 = vld [vmem:[#allocation9 + $0x18] sm:$0xff]
    %v335 = vld [vmem:[#allocation9 + $0x20] sm:$0xff]
    %v336 = vld [vmem:[#allocation9 + $0x28] sm:$0xff]
    %v337 = vld [vmem:[#allocation9 + $0x30] sm:$0xff]
    %v338 = vld [vmem:[#allocation9 + $0x38] sm:$0xff]
    %v339 = vld [vmem:[#allocation9 + $0x40] sm:$0xff]
    %v340 = vld [vmem:[#allocation9 + $0x48] sm:$0xff]
    %v341 = vld [vmem:[#allocation9 + $0x50] sm:$0xff]
    %v342 = vld [vmem:[#allocation9 + $0x58] sm:$0xff]
    %v343 = vld [vmem:[#allocation9 + $0x60] sm:$0xff]
    %v344 = vld [vmem:[#allocation9 + $0x68] sm:$0xff]
    %v345 = vld [vmem:[#allocation9 + $0x70] sm:$0xff]
    %v346 = vld [vmem:[#allocation9 + $0x78] sm:$0xff]
    %v347 = vld [vmem:[#allocation9 + $0x80] sm:$0xff]
    %v348 = vld [vmem:[#allocation9 + $0x88] sm:$0xff]
    %v349 = vld [vmem:[#allocation9 + $0x90] sm:$0xff]
    %v350 = vld [vmem:[#allocation9 + $0x98] sm:$0xff]
    %v351 = vld [vmem:[#allocation9 + $0xa0] sm:$0xff]
    %v352 = vld [vmem:[#allocation9 + $0xa8] sm:$0xff]
    %v353 = vld [vmem:[#allocation9 + $0xb0] sm:$0xff]
    %v354 = vld [vmem:[#allocation9 + $0xb8] sm:$0xff]
    %v355 = vld [vmem:[#allocation9 + $0xc0] sm:$0xff]
    %v356 = vld [vmem:[#allocation9 + $0xc8] sm:$0xff]
    %v357 = vld [vmem:[#allocation9 + $0xd0] sm:$0xff]
    %v358 = vld [vmem:[#allocation9 + $0xd8] sm:$0xff]
    %v359 = vld [vmem:[#allocation9 + $0xe0] sm:$0xff]
    %v360 = vld [vmem:[#allocation9 + $0xe8] sm:$0xff]
    %v361 = vld [vmem:[#allocation9 + $0xf0] sm:$0xff]
    %v362 = vld [vmem:[#allocation9 + $0xf8] sm:$0xff]
    %363 = vmatpush.xpose.msra.mxu0 %v361
    %364 = vmatpush.xpose.msra.mxu0 %v359
    %365 = vmatpush.xpose.msra.mxu0 %v357
    %366 = vmatpush.xpose.msra.mxu0 %v355
    %367 = vmatpush.xpose.msra.mxu0 %v353
    %368 = vmatpush.xpose.msra.mxu0 %v351
    %369 = vmatpush.xpose.msra.mxu0 %v349
    %370 = vmatpush.xpose.msra.mxu0 %v347
    %371 = vmatpush.xpose.msra.mxu0 %v345
    %372 = vmatpush.xpose.msra.mxu0 %v343
    %373 = vmatpush.xpose.msra.mxu0 %v341
    %374 = vmatpush.xpose.msra.mxu0 %v339
    %375 = vmatpush.xpose.msra.mxu0 %v337
    %376 = vmatpush.xpose.msra.mxu0 %v335
    %377 = vmatpush.xpose.msra.mxu0 %v333
    %378 = vmatpush.xpose.msra.mxu0 %v331
    %379 = vmatmul.f32.gmra.mxu0 %v325
    %v380 = vpop.f32.mrf.mxu0
    %v381 = vadd.f32 0.0, %v380
    %382 = vmatmul.f32.gmra.mxu0 %v327
    %v383 = vpop.f32.mrf.mxu0
    %v384 = vadd.f32 0.0, %v383
    %385 = vdwg.mxu0
    %386 = vmatpush.xpose.msra.mxu0 %v362
    %387 = vmatpush.xpose.msra.mxu0 %v360
    %388 = vmatpush.xpose.msra.mxu0 %v358
    %389 = vmatpush.xpose.msra.mxu0 %v356
    %390 = vmatpush.xpose.msra.mxu0 %v354
    %391 = vmatpush.xpose.msra.mxu0 %v352
    %392 = vmatpush.xpose.msra.mxu0 %v350
    %393 = vmatpush.xpose.msra.mxu0 %v348
    %394 = vmatpush.xpose.msra.mxu0 %v346
    %395 = vmatpush.xpose.msra.mxu0 %v344
    %396 = vmatpush.xpose.msra.mxu0 %v342
    %397 = vmatpush.xpose.msra.mxu0 %v340
    %398 = vmatpush.xpose.msra.mxu0 %v338
    %399 = vmatpush.xpose.msra.mxu0 %v336
    %400 = vmatpush.xpose.msra.mxu0 %v334
    %401 = vmatpush.xpose.msra.mxu0 %v332
    %402 = vmatmul.f32.gmra.mxu0 %v326
    %v403 = vpop.f32.mrf.mxu0
    %v404 = vadd.f32 %v381, %v403
    %405 = vmatmul.f32.gmra.mxu0 %v328
    %v406 = vpop.f32.mrf.mxu0
    %v407 = vadd.f32 %v384, %v406
    %408 = vdwg.mxu0
    %v409 = vadd.f32 %v329, %v404
    %v410 = vadd.f32 %v330, %v407
    %411 = vst [vmem:[#allocation2] sm:$0xff] %v409
    %412 = vst [vmem:[#allocation2 + $0x8] sm:$0xff] %v410
    // Predicated region
    $region38: #{tpu_custom_call.1} parent=1 // pred_check
      %p413 = pneg %p81
    $region39: #{tpu_custom_call.1} parent=1 // pred_check_branch
      %415 = sbr.rel (%p413) target = $region41
    $region40: #{tpu_custom_call.1} parent=1 // pred_region
      %v416 = vld [vmem:[#allocation2] sm:$0xff]
      %v417 = vld [vmem:[#allocation2 + $0x8] sm:$0xff]
      %418 = vst [vmem:[#allocation11] sm:$0xff] %v416
      %419 = vst [vmem:[#allocation11 + $0x8] sm:$0xff] %v417
    $region41: #{tpu_custom_call.1} parent=1 // pred_fallthru
      _
    // Predicated region
    $region42: #{tpu_custom_call.1} parent=1 // pred_check
      _
    $region43: #{tpu_custom_call.1} parent=1 // pred_check_branch
      %421 = sbr.rel (0) target = $region45
    $region44: #{tpu_custom_call.1} parent=1 // pred_region
      %423 = vsyncadd [#allocation5], 0
      %s424 = sshll.u32 [#allocation11], 4
      %s425 = int_to_ptr.vmem [resolvable:$true] %s424
      %s426 = sshll.u32 %s4, 4
      %s427 = int_to_ptr.hbm [resolvable:$true] %s426
      %432 = dma.vmem_to_hbm [thread:$0]  %s425, 256, %s427, [#allocation5], 128, 128, 8
    $region45: #{tpu_custom_call.1} parent=1 // pred_fallthru
      _
    // Predicated region
    $region46: #{tpu_custom_call.1} parent=1 // pred_check
      _
    $region47: #{tpu_custom_call.1} parent=1 // pred_check_branch
      %434 = sbr.rel (0) target = $region49
    $region48: #{tpu_custom_call.1} parent=1 // pred_region
      %436 = dma.done [#allocation5], 256
    $region49: #{tpu_custom_call.1} parent=1 // pred_fallthru
      _
    %437 = vsyncpa [#allocation4], 1
    %438 = vsyncpa [#allocation7], 1
    %439 = vsyncpa [#allocation10], 1
    %440 = vsyncpa [#allocation5], 1

</llo_original>
